<compile_context>
chip_gen: v5e
topology: v5e:2x2
jax: 0.10.0
libtpu: 0.0.40
codegen_flags: <defaults>
</compile_context>

<pallas_src>
import jax
import jax.numpy as jnp
from jax.experimental import pallas as pl
from jax.experimental.pallas import tpu as pltpu


def _round_up(x, m):
    return ((x + m - 1) // m) * m


def _choose_k_tiling(K, tk):
    """Pick the K tile.  Prefers never padding x along K (HBM traffic)."""
    if K <= tk:
        # One K step; a block dim equal to the full array dim is legal even
        # when it is not a multiple of 128 (K = 2 coordinate inputs).
        return K, K
    tk_cap = max(128, (tk // 128) * 128)
    t = tk_cap
    while t >= 128:
        if K % t == 0:
            return t, K                     # divides exactly -> no padding
        t -= 128
    # Rare fallback: zero-pad K up to a multiple of the tile.  The reduction
    # axis must be exact zeros, never ragged garbage.
    return tk_cap, _round_up(K, tk_cap)


def _siren_kernel_single_k(x_ref, wt_ref, b_ref, o_ref):
    # Whole K in one step: no accumulator scratch, one MXU pop + VPU sin +
    # one unmasked lane-dense store.
    z = jnp.dot(x_ref[...], wt_ref[...], preferred_element_type=jnp.float32)
    o_ref[...] = jnp.sin(z + b_ref[...]).astype(o_ref.dtype)


def _siren_kernel_acc(x_ref, wt_ref, b_ref, o_ref, acc_ref):
    # x_ref : (tm, tk)   input tile
    # wt_ref: (tk, tn)   transposed-weight tile (omega_0 folded in)
    # b_ref : (1, tn)    bias tile (omega_0 folded in)
    # o_ref : (tm, tn)   output tile
    # acc_ref: (tm, tn)  f32 accumulator resident across the K grid axis
    k = pl.program_id(2)
    nk = pl.num_programs(2)
    partial = jnp.dot(x_ref[...], wt_ref[...],
                      preferred_element_type=jnp.float32)

    @pl.when(k == 0)
    def _():
        acc_ref[...] = partial                       # no zero-init pass

    @pl.when(jnp.logical_and(k > 0, k < nk - 1))
    def _():
        acc_ref[...] = acc_ref[...] + partial

    @pl.when(k == nk - 1)
    def _():
        # Fuse last partial + bias + sin straight into the output store.
        z = acc_ref[...] + partial + b_ref[...]
        o_ref[...] = jnp.sin(z).astype(o_ref.dtype)


def prepare_siren_params(weight, bias, omega_0, *, compute_dtype=jnp.bfloat16):
    """One-time parameter prep (call once, NOT per forward).

    Folds omega_0 into W and b and stores W transposed as [K, N].
    sin(omega*(x@W^T + b)) == sin(x @ (omega*W)^T + omega*b).
    """
    wt = (float(omega_0) * weight).T.astype(compute_dtype)           # [K, N]
    b2 = (float(omega_0) * bias).reshape(1, -1).astype(jnp.float32)  # [1, N]
    return wt, b2


def siren_forward(x, wt, b2, *, tm=1024, tn=256, tk=512,
                  out_dtype=None, compute_dtype=None):
    """x: [M, K], wt: [K, N] (omega-folded, pre-transposed), b2: [1, N]."""
    M, K = x.shape
    Kw, N = wt.shape
    assert Kw == K, "weight / input feature mismatch"

    out_dtype = x.dtype if out_dtype is None else out_dtype
    # Keep the dtype knobs consistent: by default the matmul dtype is
    # whatever prepare_siren_params stored the weights in.
    if compute_dtype is None:
        compute_dtype = wt.dtype
    x = x.astype(compute_dtype)
    wt = wt.astype(compute_dtype)
    b2 = b2.astype(jnp.float32)

    # --- K (reduction) tiling: never ragged ----------------------------------
    tk_eff, Kp = _choose_k_tiling(K, tk)
    if Kp != K:
        # Zero padding is exact: padded K columns contribute 0 to the dot.
        x = jnp.pad(x, ((0, 0), (0, Kp - K)))
        wt = jnp.pad(wt, ((0, Kp - K), (0, 0)))
    nk = Kp // tk_eff

    # --- N tiling: keep output last dim lane-dense (multiple of 128) ---------
    tn_eff = min(tn, _round_up(N, 128))
    Np = _round_up(N, tn_eff)
    if Np != N:
        wt = jnp.pad(wt, ((0, 0), (0, Np - N)))      # tiny arrays; cheap pad
        b2 = jnp.pad(b2, ((0, 0), (0, Np - N)))
    gn = Np // tn_eff

    # --- M tiling: no padding, rely on ragged last block ----------------------
    tm_eff = min(tm, _round_up(M, 8))                # multiple of 8
    gm = pl.cdiv(M, tm_eff)
    if gm == 1 and M >= 16:
        # Keep >= 2 row tiles so megacore (v7x) can shard M across both cores.
        tm_eff = max(8, _round_up(pl.cdiv(M, 2), 8))
        gm = pl.cdiv(M, tm_eff)

    cost = pl.CostEstimate(
        flops=2 * M * Kp * Np,
        transcendentals=M * Np,
        bytes_accessed=int(x.size) * x.dtype.itemsize
        + int(wt.size) * wt.dtype.itemsize
        + int(b2.size) * b2.dtype.itemsize
        + M * Np * jnp.dtype(out_dtype).itemsize,
    )

    if nk == 1:
        kernel = _siren_kernel_single_k
        grid = (gm, gn)
        in_specs = [
            pl.BlockSpec((tm_eff, tk_eff), lambda i, j: (i, 0)),   # x
            pl.BlockSpec((tk_eff, tn_eff), lambda i, j: (0, j)),   # Wt
            pl.BlockSpec((1, tn_eff), lambda i, j: (0, j)),        # bias
        ]
        out_spec = pl.BlockSpec((tm_eff, tn_eff), lambda i, j: (i, j))
        scratch = []
        dims = ("parallel", "parallel")
    else:
        kernel = _siren_kernel_acc
        grid = (gm, gn, nk)
        in_specs = [
            pl.BlockSpec((tm_eff, tk_eff), lambda i, j, k: (i, k)),  # x
            pl.BlockSpec((tk_eff, tn_eff), lambda i, j, k: (k, j)),  # Wt
            pl.BlockSpec((1, tn_eff), lambda i, j, k: (0, j)),       # bias
        ]
        out_spec = pl.BlockSpec((tm_eff, tn_eff), lambda i, j, k: (i, j))
        scratch = [pltpu.VMEM((tm_eff, tn_eff), jnp.float32)]
        dims = ("parallel", "parallel", "arbitrary")

    out = pl.pallas_call(
        kernel,
        out_shape=jax.ShapeDtypeStruct((M, Np), out_dtype),
        grid_spec=pltpu.PrefetchScalarGridSpec(
            num_scalar_prefetch=0,
            grid=grid,
            in_specs=in_specs,
            out_specs=out_spec,
            scratch_shapes=scratch,
        ),
        compiler_params=pltpu.CompilerParams(dimension_semantics=dims),
        cost_estimate=cost,
    )(x, wt, b2)

    if Np != N:
        out = out[:, :N]
    return out


def init_siren_params(key, input_features, output_features,
                      is_first=False, omega_0=30):
    """Deterministic re-implementation of SIREN.initialize_weights."""
    kw, kb = jax.random.split(key)
    if is_first:
        bound_w = 1.0 / input_features
    else:
        bound_w = float(jnp.sqrt(6.0 / input_features)) / omega_0
    weight = jax.random.uniform(
        kw, (output_features, input_features),
        minval=-bound_w, maxval=bound_w, dtype=jnp.float32)
    # nn.Linear default bias init: U(-1/sqrt(fan_in), 1/sqrt(fan_in))
    bound_b = 1.0 / float(jnp.sqrt(input_features))
    bias = jax.random.uniform(
        kb, (output_features,),
        minval=-bound_b, maxval=bound_b, dtype=jnp.float32)
    return weight, bias


if __name__ == "__main__":
    key = jax.random.PRNGKey(0)
    k_xa, k_pa, k_xb, k_pb, k_xc, k_pc = jax.random.split(key, 6)
    omega_0 = 30

    # --- Test A: first layer, tiny K (coordinates), f32 compute -------------
    batch, in_f, out_f = 16, 2, 32
    x = jax.random.normal(k_xa, (batch, in_f), dtype=jnp.float32)
    w, b = init_siren_params(k_pa, in_f, out_f, is_first=True, omega_0=omega_0)
    wt, b2 = prepare_siren_params(w, b, omega_0, compute_dtype=jnp.float32)
    y = jax.block_until_ready(siren_forward(x, wt, b2))
    y_ref = jnp.sin(omega_0 * (x @ w.T + b))
    assert y.shape == (batch, out_f)
    assert jnp.allclose(y, y_ref, atol=5e-5, rtol=1e-5), float(
        jnp.max(jnp.abs(y - y_ref)))

    # --- Test B: hidden layer, bf16 compute (default), ragged batch ---------
    batch, in_f, out_f = 19, 32, 32
    x = jax.random.normal(k_xb, (batch, in_f), dtype=jnp.float32)
    w, b = init_siren_params(k_pb, in_f, out_f, is_first=False, omega_0=omega_0)
    wt, b2 = prepare_siren_params(w, b, omega_0)          # bf16 weights
    y = jax.block_until_ready(siren_forward(x, wt, b2))
    z_ref = jnp.dot(x.astype(jnp.bfloat16), wt,
                    preferred_element_type=jnp.float32) + b2
    y_ref = jnp.sin(z_ref)
    assert y.shape == (batch, out_f)
    assert jnp.allclose(y, y_ref, atol=1e-5, rtol=1e-5), float(
        jnp.max(jnp.abs(y - y_ref)))

    # --- Test C: wide K hidden layer exercising the K-accumulator path ------
    batch, in_f, out_f = 16, 256, 32
    x = jax.random.normal(k_xc, (batch, in_f), dtype=jnp.float32)
    w, b = init_siren_params(k_pc, in_f, out_f, is_first=False, omega_0=omega_0)
    wt, b2 = prepare_siren_params(w, b, omega_0, compute_dtype=jnp.float32)
    y = jax.block_until_ready(siren_forward(x, wt, b2, tk=128))  # 2 K steps
    y_ref = jnp.sin(omega_0 * (x @ w.T + b))
    assert y.shape == (batch, out_f)
    assert jnp.allclose(y, y_ref, atol=1e-4, rtol=1e-5), float(
        jnp.max(jnp.abs(y - y_ref)))

    print("KERNEL_OK")
</pallas_src>

<mosaic_0001>
module attributes {stable_mosaic.version = 11 : i64} {
  func.func @_siren_kernel_single_k(%arg0: i32, %arg1: i32, %arg2: memref<8x2xf32, #tpu.memory_space<vmem>>, %arg3: memref<2x128xf32, #tpu.memory_space<vmem>>, %arg4: memref<1x128xf32, #tpu.memory_space<vmem>>, %arg5: memref<8x128xf32, #tpu.memory_space<vmem>>) attributes {dimension_semantics = [#tpu.dimension_semantics<parallel>, #tpu.dimension_semantics<parallel>], iteration_bounds = array<i64: 2, 1>, scalar_prefetch = 0 : i64, scratch_operands = 0 : i64, tpu.core_type = #tpu.core_type<tc>, window_params = [{transform_indices = @transform_0, window_bounds = array<i64: 8, 2>}, {transform_indices = @transform_1, window_bounds = array<i64: 2, 128>}, {transform_indices = @transform_2, window_bounds = array<i64: 1, 128>}, {transform_indices = @transform_3, window_bounds = array<i64: 8, 128>}]} {
    %c0 = arith.constant 0 : index
    %c0_0 = arith.constant 0 : index
    %0 = vector.load %arg2[%c0, %c0_0] : memref<8x2xf32, #tpu.memory_space<vmem>>, vector<8x2xf32>
    %c0_1 = arith.constant 0 : index
    %c0_2 = arith.constant 0 : index
    %1 = vector.load %arg3[%c0_1, %c0_2] : memref<2x128xf32, #tpu.memory_space<vmem>>, vector<2x128xf32>
    %cst = arith.constant dense<0.000000e+00> : vector<8x128xf32>
    %2 = tpu.matmul %0, %1, %cst {dimension_numbers = #tpu.dot_dimension_numbers<[1], [0], [0], [1], [0, 0, 1, 1], [], []>} : vector<8x2xf32>, vector<2x128xf32>, vector<8x128xf32> -> vector<8x128xf32>
    %c0_3 = arith.constant 0 : index
    %c0_4 = arith.constant 0 : index
    %3 = vector.load %arg4[%c0_3, %c0_4] : memref<1x128xf32, #tpu.memory_space<vmem>>, vector<1x128xf32>
    %4 = vector.broadcast %3 : vector<1x128xf32> to vector<8x128xf32>
    %5 = arith.addf %2, %4 : vector<8x128xf32>
    %6 = math.sin %5 : vector<8x128xf32>
    %c0_5 = arith.constant 0 : index
    %c0_6 = arith.constant 0 : index
    %7 = vector.load %arg5[%c0_5, %c0_6] : memref<8x128xf32, #tpu.memory_space<vmem>>, vector<8x128xf32>
    tpu.vector_store %arg5[%c0_5, %c0_6], %6 {strides = array<i32>} : memref<8x128xf32, #tpu.memory_space<vmem>>, vector<8x128xf32>,
    return
  }
  func.func @transform_0(%arg0: i32, %arg1: i32) -> (i32, i32) {
    %c0_i32 = arith.constant 0 : i32
    %c0_i32_0 = arith.constant 0 : i32
    return %arg0, %c0_i32 : i32, i32
  }
  func.func @transform_1(%arg0: i32, %arg1: i32) -> (i32, i32) {
    %c0_i32 = arith.constant 0 : i32
    %c0_i32_0 = arith.constant 0 : i32
    return %c0_i32, %arg1 : i32, i32
  }
  func.func @transform_2(%arg0: i32, %arg1: i32) -> (i32, i32) {
    %c0_i32 = arith.constant 0 : i32
    %c0_i32_0 = arith.constant 0 : i32
    return %c0_i32, %arg1 : i32, i32
  }
  func.func @transform_3(%arg0: i32, %arg1: i32) -> (i32, i32) {
    %c0_i32 = arith.constant 0 : i32
    return %arg0, %arg1 : i32, i32
  }
}

</mosaic_0001>

<llo_original>
// kernel: tpu_custom_call.1
$region0: #{tpu_custom_call.1}
  #allocation0 [shape = 'u32[]', space=smem, size = 0x4, offset = 0x4, fixed_abs, tag = 'smem constant byte address 0x4 - core index']
  #allocation1 [shape = 'u32[72,128]{1,0:T(1,128)}', space=vmem, size = 0x9000, scoped, tag = 'internal scratch']
  %s0 = inlined_call_operand.vmem [shape: f32[16,2], index: 0, kind: input, shape index: {}]
  %s1 = inlined_call_operand.vmem [shape: f32[2,128], index: 1, kind: input, shape index: {}]
  %s2 = inlined_call_operand.vmem [shape: f32[1,128], index: 2, kind: input, shape index: {}]
  %s3 = inlined_call_operand.hbm [shape: f32[16,128], index: 3, kind: output, shape index: {}]
  %s4 = sld [smem:[#allocation0]]
  $region45: #{tpu_custom_call.1} parent=0
    _
  %s6 = ssub.s32 1, %s4
  %s7 = scalar_select 0, %s6, %s4
  $region1: #{tpu_custom_call.1} parent=0
    #allocation2 [shape = 'u8[8192]{0}', space=vmem, size = 0x2000, scoped, tag = 'output window, operand 0']
    #allocation3 [shape = 's32[2]{0}', space=sflag, size = 0x8, scoped, tag = 'scoped memory for tpu_custom_call.1']
    %8 = vsyncpa [#allocation3], 0
    %s9 = scalar_lea.sflag [#allocation3], 1
    %10 = vsyncpa %s9, 0
    loop: start=0, step=1, limit=4
    $region2: #{tpu_custom_call.1} parent=1 // loop_pre_header
      _
    $region3: #{tpu_custom_call.1} parent=1 // loop_header
      %s12 = sphi 0, %s16
      %p13 = scmp.ge.s32.totalorder %s12, 4
      %s19 = sphi 0, %s31
      %s20 = sphi 0, %s27
      %s21 = sphi 0, %s19
      %s22 = sphi 0, %s20
      %s23 = sphi 0, %s21
      %s24 = sphi 0, %s22
      %s34 = sphi 0, %s36
      %s37 = sphi 0, %s34
      %s38 = sphi 0, %s37
      %s54 = sphi 0, %s38
      %s60 = sphi 0, %s62
      %s63 = sphi 0, %s60
      %s64 = sphi 0, %s63
      %s80 = sphi 0, %s64
      %s86 = sphi 0, %s88
      %s89 = sphi 0, %s86
      %s90 = sphi 0, %s89
      %s106 = sphi 0, %s90
      %s114 = sphi 0, %s116
      %s117 = sphi 0, %s114
      %s118 = sphi 0, %s117
      %s134 = sphi 0, %s118
    $region4: #{tpu_custom_call.1} parent=1 // loop_header_branch
      %15 = sbr.rel (%p13) target = $region8
    $region5: #{tpu_custom_call.1} parent=1 // loop_body
      %s17 = ssub.s32 %s12, 1
      %s18 = ssub.s32 %s12, 2
      %s25 = sadd.s32 1, %s20
      %p26 = scmp.ge.s32.totalorder %s25, 1
      %s27 = scalar_select %p26, 0, %s25
      %s28 = sadd.s32 1, %s19
      %s29 = scalar_select %p26, %s28, %s19
      %p30 = scmp.ge.s32.totalorder %s29, 2
      %s31 = scalar_select %p30, 0, %s29
      %s32 = ssub.s32 %s19, %s31
      %p33 = scmp.eq.s32.totalorder %s32, 0
      %s35 = sadd.s32 %s34, 1
      %s36 = scalar_select %p33, %s34, %s35
      %p39 = pneg %p33
      %p40 = scmp.eq.s32.totalorder %s12, 1
      %p41 = por %p39, %p40
      %p42 = scmp.ne.s32.totalorder %s34, %s37
      %p43 = scmp.eq.s32.totalorder %s12, 0
      %p44 = por %p42, %p43
      %p45 = scmp.ne.s32.totalorder %s34, %s37
      %p46 = scmp.eq.s32.totalorder %s17, 1
      %p47 = por %p45, %p46
      %p48 = scmp.ne.s32.totalorder %s37, %s38
      %p49 = scmp.eq.s32.totalorder %s17, 0
      %p50 = por %p48, %p49
      %p51 = scmp.ne.s32.totalorder %s37, %s38
      %p52 = scmp.eq.s32.totalorder %s18, 1
      %p53 = por %p51, %p52
      %p55 = scmp.ne.s32.totalorder %s38, %s54
      %p56 = scmp.eq.s32.totalorder %s18, 0
      %p57 = por %p55, %p56
      %s58 = ssub.s32 %s20, %s27
      %p59 = scmp.eq.s32.totalorder %s58, 0
      %s61 = sadd.s32 %s60, 1
      %s62 = scalar_select %p59, %s60, %s61
      %p65 = pneg %p59
      %p66 = scmp.eq.s32.totalorder %s12, 1
      %p67 = por %p65, %p66
      %p68 = scmp.ne.s32.totalorder %s60, %s63
      %p69 = scmp.eq.s32.totalorder %s12, 0
      %p70 = por %p68, %p69
      %p71 = scmp.ne.s32.totalorder %s60, %s63
      %p72 = scmp.eq.s32.totalorder %s17, 1
      %p73 = por %p71, %p72
      %p74 = scmp.ne.s32.totalorder %s63, %s64
      %p75 = scmp.eq.s32.totalorder %s17, 0
      %p76 = por %p74, %p75
      %p77 = scmp.ne.s32.totalorder %s63, %s64
      %p78 = scmp.eq.s32.totalorder %s18, 1
      %p79 = por %p77, %p78
      %p81 = scmp.ne.s32.totalorder %s64, %s80
      %p82 = scmp.eq.s32.totalorder %s18, 0
      %p83 = por %p81, %p82
      %s84 = ssub.s32 %s20, %s27
      %p85 = scmp.eq.s32.totalorder %s84, 0
      %s87 = sadd.s32 %s86, 1
      %s88 = scalar_select %p85, %s86, %s87
      %p91 = pneg %p85
      %p92 = scmp.eq.s32.totalorder %s12, 1
      %p93 = por %p91, %p92
      %p94 = scmp.ne.s32.totalorder %s86, %s89
      %p95 = scmp.eq.s32.totalorder %s12, 0
      %p96 = por %p94, %p95
      %p97 = scmp.ne.s32.totalorder %s86, %s89
      %p98 = scmp.eq.s32.totalorder %s17, 1
      %p99 = por %p97, %p98
      %p100 = scmp.ne.s32.totalorder %s89, %s90
      %p101 = scmp.eq.s32.totalorder %s17, 0
      %p102 = por %p100, %p101
      %p103 = scmp.ne.s32.totalorder %s89, %s90
      %p104 = scmp.eq.s32.totalorder %s18, 1
      %p105 = por %p103, %p104
      %p107 = scmp.ne.s32.totalorder %s90, %s106
      %p108 = scmp.eq.s32.totalorder %s18, 0
      %p109 = por %p107, %p108
      %s110 = ssub.s32 %s19, %s31
      %s111 = ssub.s32 %s20, %s27
      %s112 = sor.u32 %s110, %s111
      %p113 = scmp.eq.s32.totalorder %s112, 0
      %s115 = sadd.s32 %s114, 1
      %s116 = scalar_select %p113, %s114, %s115
      %p119 = pneg %p113
      %p120 = scmp.eq.s32.totalorder %s12, 1
      %p121 = por %p119, %p120
      %p122 = scmp.ne.s32.totalorder %s114, %s117
      %p123 = scmp.eq.s32.totalorder %s12, 0
      %p124 = por %p122, %p123
      %p125 = scmp.ne.s32.totalorder %s114, %s117
      %p126 = scmp.eq.s32.totalorder %s17, 1
      %p127 = por %p125, %p126
      %p128 = scmp.ne.s32.totalorder %s117, %s118
      %p129 = scmp.eq.s32.totalorder %s17, 0
      %p130 = por %p128, %p129
      %p131 = scmp.ne.s32.totalorder %s117, %s118
      %p132 = scmp.eq.s32.totalorder %s18, 1
      %p133 = por %p131, %p132
      %p135 = scmp.ne.s32.totalorder %s118, %s134
      %p136 = scmp.eq.s32.totalorder %s18, 0
      %p137 = por %p135, %p136
      %p138 = scmp.le.s32.totalorder 1, %s12
      %p139 = scmp.lt.s32.totalorder %s12, 3
      %p140 = pnand %p138, %p139
      %p141 = pneg %p140
      // Predicated region
      $region9: #{tpu_custom_call.1} parent=5 // pred_check
        _
      $region10: #{tpu_custom_call.1} parent=5 // pred_check_branch
        %143 = sbr.rel (%p140) target = $region12
      $region11: #{tpu_custom_call.1} parent=5 // pred_region
        %s144 = ssub.s32 %s12, 1
        // Predicated region
        $region13: #{tpu_custom_call.1} parent=11 // pred_check
          %p145 = pneg %p76
        $region14: #{tpu_custom_call.1} parent=11 // pred_check_branch
          %147 = sbr.rel (%p145) target = $region16
        $region15: #{tpu_custom_call.1} parent=11 // pred_region
          %p148 = scmp.lt.s32.totalorder %s22, 0
          %s149 = scalar_select %p148, %s22, 0
          %s150 = smul.addr %s149, 2
          %s151 = scalar_lea.vmem %s1, %s150
        $region16: #{tpu_custom_call.1} parent=11 // pred_fallthru
          _
        // Predicated region
        $region17: #{tpu_custom_call.1} parent=11 // pred_check
          %p152 = pneg %p102
        $region18: #{tpu_custom_call.1} parent=11 // pred_check_branch
          %154 = sbr.rel (%p152) target = $region20
        $region19: #{tpu_custom_call.1} parent=11 // pred_region
          %p155 = scmp.lt.s32.totalorder %s22, 0
          %s156 = scalar_select %p155, %s22, 0
          %s157 = scalar_lea.vmem %s2, %s156
        $region20: #{tpu_custom_call.1} parent=11 // pred_fallthru
          _
      $region12: #{tpu_custom_call.1} parent=5 // pred_fallthru
        _
      %p158 = scmp.lt.s32.totalorder %s12, 2
      // Predicated region
      $region21: #{tpu_custom_call.1} parent=5 // pred_check
        %p159 = pneg %p158
      $region22: #{tpu_custom_call.1} parent=5 // pred_check_branch
        %161 = sbr.rel (%p159) target = $region24
      $region23: #{tpu_custom_call.1} parent=5 // pred_region
        // Predicated region
        $region25: #{tpu_custom_call.1} parent=23 // pred_check
          %p162 = pneg %p44
        $region26: #{tpu_custom_call.1} parent=23 // pred_check_branch
          %164 = sbr.rel (%p162) target = $region28
        $region27: #{tpu_custom_call.1} parent=23 // pred_region
          %p165 = scmp.lt.s32.totalorder %s19, 1
          %s166 = scalar_select %p165, %s19, 1
          %s167 = smul.addr %s166, 8
          %s168 = scalar_lea.vmem %s0, %s167
        $region28: #{tpu_custom_call.1} parent=23 // pred_fallthru
          _
      $region24: #{tpu_custom_call.1} parent=5 // pred_fallthru
        _
      %p169 = scmp.le.s32.totalorder 1, %s12
      %p170 = scmp.lt.s32.totalorder %s12, 3
      %p171 = pnand %p169, %p170
      %p172 = pneg %p171
      // Predicated region
      $region29: #{tpu_custom_call.1} parent=5 // pred_check
        _
      $region30: #{tpu_custom_call.1} parent=5 // pred_check_branch
        %174 = sbr.rel (%p171) target = $region32
      $region31: #{tpu_custom_call.1} parent=5 // pred_region
        %s175 = ssub.s32 %s12, 1
        %p176 = scmp.lt.s32.totalorder %s21, 1
        %s177 = scalar_select %p176, %s21, 1
        %s178 = smul.addr %s177, 8
        %s179 = scalar_lea.vmem %s0, %s178
        %p180 = pneg %p50
        %p181 = pneg %p47
        %p182 = scmp.lt.s32.totalorder %s22, 0
        %s183 = scalar_select %p182, %s22, 0
        %s184 = smul.addr %s183, 2
        %s185 = scalar_lea.vmem %s1, %s184
        %p186 = pneg %p76
        %p187 = pneg %p73
        %p188 = scmp.lt.s32.totalorder %s22, 0
        %s189 = scalar_select %p188, %s22, 0
        %s190 = scalar_lea.vmem %s2, %s189
        %p191 = pneg %p102
        %p192 = pneg %p99
        %p193 = pneg %p130
        %p194 = pneg %p127
        %s195 = sand.u32 %s117, 1
        %s196 = scalar_lea.sflag [#allocation3], %s195
        %s197 = sand.u32 %s117, 1
        %s198 = smul.addr %s197, 8
        %s199 = scalar_lea.vmem [#allocation2], %s198
        %p200 = scmp.lt.s32.totalorder %s21, 1
        %s201 = scalar_select %p200, %s21, 1
        %s202 = smul.addr %s201, 8
        %s203 = scalar_lea.vmem %s0, %s202
        %p204 = scmp.lt.s32.totalorder %s22, 0
        %s205 = scalar_select %p204, %s22, 0
        %s206 = smul.addr %s205, 2
        %s207 = scalar_lea.vmem %s1, %s206
        %p208 = scmp.lt.s32.totalorder %s22, 0
        %s209 = scalar_select %p208, %s22, 0
        %s210 = scalar_lea.vmem %s2, %s209
        %v211 = vld [vmem:[%s203] sm:$0xff]
        %v212 = vld [vmem:[%s207] sm:$0x3]
        %v213 = vld [vmem:[%s210] sm:$0x1]
        %v215 = vperm.slane %v213, 0
        %vm217 = vcmask 15360
        %v219 = vsel %vm217, %v211, 0
        %vm221 = vcmask 1041408
        %v223 = vsel %vm221, %v212, 0
        %225 = vmatpush.msra.mxu0 0.0
        %226 = vmatpush.msra.mxu0 0.0
        %227 = vmatpush.msra.mxu0 0.0
        %228 = vmatpush.msra.mxu0 0.0
        %229 = vmatpush.msra.mxu0 0.0
        %230 = vmatpush.msra.mxu0 0.0
        %231 = vmatpush.msra.mxu0 0.0
        %232 = vmatpush.msra.mxu0 0.0
        %233 = vmatpush.msra.mxu0 0.0
        %234 = vmatpush.msra.mxu0 0.0
        %235 = vmatpush.msra.mxu0 0.0
        %236 = vmatpush.msra.mxu0 0.0
        %237 = vmatpush.msra.mxu0 0.0
        %238 = vmatpush.msra.mxu0 0.0
        %239 = vmatpush.msra.mxu0 0.0
        %240 = vmatpush.msra.mxu0 %v223
        %241 = vmatmul.f32.gmra.mxu0 %v219
        %v242 = vpop.f32.mrf.mxu0
        %v243 = vadd.f32 %v215, %v242
        %244 = vdwg.mxu0
        %v245 = vand.u32 2147483647, %v243
        %vm246 = vcmp.le.f32.partialorder %v245, 0.7853982
        %vm247 = vcmp.lt.s32.totalorder %v243, 0
        %v248 = vand.u32 %v243, 2139095040
        %v249 = vshrl.u32 %v248, 23
        %v250 = vsub.s32 %v249, 127
        %v251 = vand.u32 2147483647, %v243
        %v252 = vand.u32 %v251, 8388607
        %v253 = vor.u32 %v252, 8388608
        %v254 = vsub.s32 0, %v253
        %v255 = vadd.s32 %v250, 1
        %vm256 = vcmp.gt.s32.totalorder %v255, 0
        %v257 = vsel %vm256, %v255, 0
        %v258 = vshrl.u32 %v257, 5
        %v259 = vand.u32 %v257, 31
        %v260 = vsub.s32 32, %v259
        %v261 = vshrl.u32 683565275, %v260
        %v262 = vshll.u32 683565275, %v259
        %v263 = vshrl.u32 2475754826, %v260
        %v264 = vor.u32 %v262, %v263
        %v265 = vshll.u32 2475754826, %v259
        %v266 = vshrl.u32 2131351028, %v260
        %v267 = vor.u32 %v265, %v266
        %v268 = vshll.u32 2131351028, %v259
        %v269 = vshrl.u32 2102212464, %v260
        %v270 = vor.u32 %v268, %v269
        %v271 = vshll.u32 2102212464, %v259
        %v272 = vshrl.u32 920167782, %v260
        %v273 = vor.u32 %v271, %v272
        %v274 = vshll.u32 920167782, %v259
        %v275 = vshrl.u32 1326507024, %v260
        %v276 = vor.u32 %v274, %v275
        %vm277 = vcmp.lt.s32.totalorder %v258, 1
        %vm278 = vcmp.lt.s32.totalorder %v258, 2
        %vm279 = vcmp.lt.s32.totalorder %v258, 3
        %vm280 = vcmp.lt.s32.totalorder %v258, 4
        %v281 = vsel %vm277, %v261, %v264
        %v282 = vsel %vm280, %v270, 2102212464
        %v283 = vsel %vm279, %v267, %v282
        %v284 = vsel %vm278, %v281, %v283
        %v285 = vsel %vm277, %v264, %v267
        %v286 = vsel %vm280, %v273, 920167782
        %v287 = vsel %vm279, %v270, %v286
        %v288 = vsel %vm278, %v285, %v287
        %v289 = vsel %vm277, %v267, %v270
        %v290 = vsel %vm280, %v276, 1326507024
        %v291 = vsel %vm279, %v273, %v290
        %v292 = vsel %vm278, %v289, %v291
        %v293 = vshll.u32 %v253, 8
        %v294 = vand.u32 %v293, 65535
        %v295 = vshrl.u32 %v293, 16
        %v296 = vand.u32 %v292, 65535
        %v297 = vshrl.u32 %v292, 16
        %v298 = vmul.u32 %v294, %v296
        %v299 = vmul.u32 %v294, %v297
        %v300 = vmul.u32 %v295, %v296
        %v301 = vmul.u32 %v295, %v297
        %v302 = vshll.u32 %v299, 16
        %v303 = vshrl.u32 %v299, 16
        %v304 = vshll.u32 %v300, 16
        %v305 = vshrl.u32 %v300, 16
        %vm306 = vc.u32 %v298, %v302
        %v307 = vsel %vm306, 1, 0
        %v308 = vadd.s32 %v298, %v302
        %v309 = vadd.s32 %v301, %v307
        %vm310 = vc.u32 %v308, %v304
        %v311 = vsel %vm310, 1, 0
        %v312 = vadd.s32 %v308, %v304
        %v313 = vadd.s32 %v309, %v311
        %v314 = vadd.s32 %v313, %v303
        %v315 = vadd.s32 %v314, %v305
        %v316 = vand.u32 %v293, 65535
        %v317 = vshrl.u32 %v293, 16
        %v318 = vand.u32 %v288, 65535
        %v319 = vshrl.u32 %v288, 16
        %v320 = vmul.u32 %v316, %v318
        %v321 = vmul.u32 %v316, %v319
        %v322 = vmul.u32 %v317, %v318
        %v323 = vmul.u32 %v317, %v319
        %v324 = vshll.u32 %v321, 16
        %v325 = vshrl.u32 %v321, 16
        %v326 = vshll.u32 %v322, 16
        %v327 = vshrl.u32 %v322, 16
        %vm328 = vc.u32 %v320, %v324
        %v329 = vsel %vm328, 1, 0
        %v330 = vadd.s32 %v320, %v324
        %v331 = vadd.s32 %v323, %v329
        %vm332 = vc.u32 %v330, %v326
        %v333 = vsel %vm332, 1, 0
        %v334 = vadd.s32 %v330, %v326
        %v335 = vadd.s32 %v331, %v333
        %v336 = vadd.s32 %v335, %v325
        %v337 = vadd.s32 %v336, %v327
        %v338 = vmul.u32 %v293, %v284
        %v339 = vadd.s32 %v315, %v334
        %vm340 = vc.u32 %v315, %v334
        %v341 = vadd.s32 %v337, 1
        %v342 = vsel %vm340, %v341, %v337
        %v343 = vadd.s32 %v338, %v342
        %v344 = vadd.s32 %v343, 536870912
        %v345 = vshrl.u32 %v344, 30
        %v346 = vshll.u32 %v345, 30
        %v347 = vsub.s32 %v343, %v346
        %vm348 = vcmp.lt.s32.totalorder %v347, 0
        %v349 = vsub.s32 0, %v347
        %v350 = vsel %vm348, %v349, %v347
        %v351 = vclz %v350
        %v352 = vsub.s32 %v351, 2
        %vm353 = vcmp.gt.s32.totalorder 0, %v352
        %v354 = vsel %vm353, 0, %v352
        %v355 = vsub.s32 32, %v354
        %v356 = vshll.u32 %v347, %v354
        %v357 = vshrl.u32 %v339, %v355
        %v358 = vor.u32 %v356, %v357
        %v359 = vsub.s32 4294967266, %v354
        %v360 = vadd.s32 %v359, 127
        %v361 = vshll.u32 %v360, 23
        %v362 = vor.u32 4788187, %v361
        %v363 = vand.u32 2147483647, %v362
        %v365 = vcvt.s32.f32 %v358
        %v366 = vmul.f32 %v365, %v363
        %v367 = vxor.u32 %v366, 2147483648
        %v368 = vsel %vm247, %v367, %v366
        %v369 = vsub.s32 4, %v345
        %v370 = vsel %vm247, %v369, %v345
        %v371 = vsel %vm246, %v243, %v368
        %v372 = vsel %vm246, 0, %v370
        %v373 = vmul.f32 %v371, %v371
        %v374 = vmul.f32 %v373, -0.001358992
        %v375 = vadd.f32 %v374, 0.041655596
        %v376 = vmul.f32 %v373, %v375
        %v377 = vadd.f32 %v376, -0.4999988
        %v378 = vmul.f32 %v373, %v377
        %v379 = vadd.f32 1.0, %v378
        %v380 = vmul.f32 %v371, %v371
        %v381 = vmul.f32 %v380, -0.00019511016
        %v382 = vadd.f32 %v381, 0.008332121
        %v383 = vmul.f32 %v380, %v382
        %v384 = vadd.f32 %v383, -0.16666654
        %v385 = vmul.f32 %v380, %v384
        %v386 = vadd.f32 %v385, 1.0
        %v387 = vmul.f32 %v386, %v371
        %vm388 = vweird.f32 %v243
        %v389 = vadd.s32 %v372, 3
        %v390 = vand.u32 %v389, 3
        %vm391 = vcmp.lt.s32.totalorder %v390, 2
        %vm392 = vcmp.eq.s32.totalorder %v390, 0
        %v393 = vxor.u32 %v387, 2147483648
        %v394 = vsel %vm392, %v379, %v393
        %vm395 = vcmp.eq.s32.totalorder %v390, 2
        %v396 = vxor.u32 %v379, 2147483648
        %v397 = vsel %vm395, %v396, %v387
        %v398 = vsel %vm391, %v394, %v397
        %v399 = vsel %vm388, nan, %v398
        %400 = vst [vmem:[%s199] sm:$0xff] %v399
        %s401 = sand.u32 %s117, 1
        %s402 = scalar_lea.sflag [#allocation3], %s401
        %s403 = sand.u32 %s117, 1
        %s404 = smul.addr %s403, 8
        %s405 = scalar_lea.vmem [#allocation2], %s404
        // Predicated region
        $region33: #{tpu_custom_call.1} parent=31 // pred_check
          %p406 = pneg %p127
        $region34: #{tpu_custom_call.1} parent=31 // pred_check_branch
          %408 = sbr.rel (%p406) target = $region36
        $region35: #{tpu_custom_call.1} parent=31 // pred_region
          %410 = vsyncadd %s402, 0
          %s411 = sadd.s32 %s22, %s21
          %s412 = smul.addr %s411, 8
          %s413 = scalar_lea.hbm %s3, %s412
          %s415 = sshll.u32 %s405, 4
          %s416 = int_to_ptr.vmem [resolvable:$true] %s415
          %s417 = sshll.u32 %s413, 4
          %s418 = int_to_ptr.hbm [resolvable:$true] %s417
          %420 = dma.vmem_to_hbm [thread:$0]  %s416, 128, %s418, %s402
        $region36: #{tpu_custom_call.1} parent=31 // pred_fallthru
          _
      $region32: #{tpu_custom_call.1} parent=5 // pred_fallthru
        _
      %p421 = scmp.le.s32.totalorder 2, %s12
      // Predicated region
      $region37: #{tpu_custom_call.1} parent=5 // pred_check
        %p422 = pneg %p421
      $region38: #{tpu_custom_call.1} parent=5 // pred_check_branch
        %424 = sbr.rel (%p422) target = $region40
      $region39: #{tpu_custom_call.1} parent=5 // pred_region
        %s425 = ssub.s32 %s12, 2
        // Predicated region
        $region41: #{tpu_custom_call.1} parent=39 // pred_check
          %p426 = pneg %p133
        $region42: #{tpu_custom_call.1} parent=39 // pred_check_branch
          %428 = sbr.rel (%p426) target = $region44
        $region43: #{tpu_custom_call.1} parent=39 // pred_region
          %s429 = sand.u32 %s118, 1
          %s430 = scalar_lea.sflag [#allocation3], %s429
          %s431 = sand.u32 %s118, 1
          %s432 = smul.addr %s431, 8
          %s433 = scalar_lea.vmem [#allocation2], %s432
          %435 = dma.done %s430, 128
        $region44: #{tpu_custom_call.1} parent=39 // pred_fallthru
          _
      $region40: #{tpu_custom_call.1} parent=5 // pred_fallthru
        _
    $region6: #{tpu_custom_call.1} parent=1 // loop_footer
      %s16 = sadd.s32 1, %s12
    $region7: #{tpu_custom_call.1} parent=1 // loop_footer_branch
      %11 = sbr.rel target = $region3
    $region8: #{tpu_custom_call.1} parent=1 // loop_exit
      _
    %436 = vsyncpa [#allocation3], 1
    %s437 = scalar_lea.sflag [#allocation3], 1
    %438 = vsyncpa %s437, 1

</llo_original>
